<compile_context>
chip_gen: v7x
topology: tpu7x:2x2x1
jax: 0.10.0
libtpu: 0.0.40
codegen_flags: <defaults>
</compile_context>

<pallas_src>
import jax
import jax.numpy as jnp
from jax.experimental import pallas as pl
from jax.experimental.pallas import tpu as pltpu

LANE = 128
SUBLANE = 8


def _round_up(n, m):
    return ((n + m - 1) // m) * m


def _lipswish(x):
    # LipSwish(x) = 0.909 * x * sigmoid(x); sigmoid via the tanh identity so the
    # transcendental lands on the EUP instead of burning VALU slots on a divide.
    return 0.909 * x * (0.5 * jnp.tanh(0.5 * x) + 0.5)


def _mlp_apply(h, weights):
    """Fused FFNN: Linear + LipSwish hidden layers, tanh final.

    h: [rows, in_pad] f32.  weights: list of (W bf16 [in_pad, out_pad],
    b f32 [1, out_pad]).  bf16 matmul operands, f32 accumulation/activations.
    Shared between the Pallas kernels and the pure-JAX reference.
    """
    n = len(weights)
    for li, (w, b) in enumerate(weights):
        acc = jnp.dot(h.astype(jnp.bfloat16), w,
                      preferred_element_type=jnp.float32) + b
        h = _lipswish(acc) if li < n - 1 else jnp.tanh(acc)
    return h


# ---------------------------------------------------------------------------
# FFNN kernel (used for the embedding and readout networks)
# ---------------------------------------------------------------------------

def _make_ffnn_kernel(n_linear):
    def kernel(x_ref, *refs):
        out_ref = refs[-1]
        prm = refs[:-1]
        wb = [(prm[2 * i][...], prm[2 * i + 1][...]) for i in range(n_linear)]
        h = x_ref[...].astype(jnp.float32)
        out_ref[...] = _mlp_apply(h, wb).astype(out_ref.dtype)
    return kernel


def _weight_specs(padded_params):
    # Constant index_map -> block stays resident across the batch grid;
    # Buffered(1) avoids pointless double-buffering of the weights (VMEM).
    specs = []
    for w, b in padded_params:
        specs.append(pl.BlockSpec(w.shape, lambda i: (0, 0),
                                  pipeline_mode=pl.Buffered(1)))
        specs.append(pl.BlockSpec(b.shape, lambda i: (0, 0),
                                  pipeline_mode=pl.Buffered(1)))
    return specs


def ffnn_forward(x, padded_params, *, batch_tile=128):
    """x: [rows, in_pad] f32 (features already padded to 128 lanes).
    Returns [rows, out_pad] f32."""
    rows, in_pad = x.shape
    out_pad = padded_params[-1][1].shape[1]
    n_linear = len(padded_params)

    tb = min(batch_tile, _round_up(rows, SUBLANE))
    rows_pad = _round_up(rows, tb)
    if rows_pad != rows:
        x = jnp.pad(x, ((0, rows_pad - rows), (0, 0)))

    flat = [x]
    for w, b in padded_params:
        flat += [w, b]

    in_specs = ([pl.BlockSpec((tb, in_pad), lambda i: (i, 0))]
                + _weight_specs(padded_params))

    flops = 2 * rows_pad * sum(int(w.shape[0]) * int(w.shape[1])
                               for w, _ in padded_params)
    transcendentals = rows_pad * sum(int(w.shape[1]) for w, _ in padded_params)
    bytes_accessed = int(
        x.size * x.dtype.itemsize
        + sum(w.size * w.dtype.itemsize + b.size * b.dtype.itemsize
              for w, b in padded_params)
        + rows_pad * out_pad * 4)

    out = pl.pallas_call(
        _make_ffnn_kernel(n_linear),
        out_shape=jax.ShapeDtypeStruct((rows_pad, out_pad), jnp.float32),
        grid_spec=pltpu.PrefetchScalarGridSpec(
            num_scalar_prefetch=0,
            grid=(rows_pad // tb,),
            in_specs=in_specs,
            out_specs=pl.BlockSpec((tb, out_pad), lambda i: (i, 0)),
        ),
        compiler_params=pltpu.CompilerParams(
            dimension_semantics=("parallel",)),
        cost_estimate=pl.CostEstimate(
            flops=int(flops), transcendentals=int(transcendentals),
            bytes_accessed=bytes_accessed),
    )(*flat)
    return out[:rows]


# ---------------------------------------------------------------------------
# Fused SDE-path kernel: whole Euler-Maruyama time loop in one pallas_call
# ---------------------------------------------------------------------------

def _make_sde_kernel(n_drift, n_diff, num_steps, dt):
    def kernel(x0_ref, dw_ref, *refs):
        out_ref = refs[-1]
        prm = refs[:-1]
        drift_refs = [(prm[2 * i], prm[2 * i + 1]) for i in range(n_drift)]
        off = 2 * n_drift
        diff_refs = [(prm[off + 2 * i], prm[off + 2 * i + 1])
                     for i in range(n_diff)]

        x = x0_ref[...].astype(jnp.float32)
        out_ref[pl.ds(0, 1)] = x[None].astype(out_ref.dtype)

        # The time loop is a recurrence (cannot be a grid axis); it is fully
        # unrolled in-kernel (num_steps is small & static) so one launch covers
        # every drift/diffusion evaluation and state update.
        for t in range(num_steps - 1):
            f = _mlp_apply(x, [(w[...], b[...]) for w, b in drift_refs])
            g = _mlp_apply(x, [(w[...], b[...]) for w, b in diff_refs])
            dwt = dw_ref[pl.ds(t, 1)][0].astype(jnp.float32)
            x = x + dt * f + g * dwt          # diagonal noise: elementwise
            out_ref[pl.ds(t + 1, 1)] = x[None].astype(out_ref.dtype)

    return kernel


def sde_path_forward(x0, dw, drift_params, diff_params, dt, *, batch_tile=128):
    """Euler-Maruyama path.  x0: [B, H_pad] f32, dw: [T-1, B, H_pad] f32.
    Returns xs: [T, B, H_pad] f32 (xs[0] == x0)."""
    B, h_pad = x0.shape
    tm1 = dw.shape[0]
    T = tm1 + 1

    tb = min(batch_tile, _round_up(B, SUBLANE))
    b_pad = _round_up(B, tb)
    if b_pad != B:
        x0 = jnp.pad(x0, ((0, b_pad - B), (0, 0)))
        dw = jnp.pad(dw, ((0, 0), (0, b_pad - B), (0, 0)))

    all_params = list(drift_params) + list(diff_params)
    flat = [x0, dw]
    for w, b in all_params:
        flat += [w, b]

    in_specs = ([pl.BlockSpec((tb, h_pad), lambda i: (i, 0)),
                 pl.BlockSpec((tm1, tb, h_pad), lambda i: (0, i, 0))]
                + _weight_specs(all_params))

    flops = int(2 * b_pad * tm1 * sum(int(w.shape[0]) * int(w.shape[1])
                                      for w, _ in all_params)
                + 4 * b_pad * tm1 * h_pad)
    transcendentals = int(b_pad * tm1 * sum(int(w.shape[1])
                                            for w, _ in all_params))
    bytes_accessed = int(
        x0.size * 4 + dw.size * 4 + T * b_pad * h_pad * 4
        + sum(w.size * w.dtype.itemsize + b.size * b.dtype.itemsize
              for w, b in all_params))

    xs = pl.pallas_call(
        _make_sde_kernel(len(drift_params), len(diff_params), T, float(dt)),
        out_shape=jax.ShapeDtypeStruct((T, b_pad, h_pad), jnp.float32),
        grid_spec=pltpu.PrefetchScalarGridSpec(
            num_scalar_prefetch=0,
            grid=(b_pad // tb,),
            in_specs=in_specs,
            out_specs=pl.BlockSpec((T, tb, h_pad), lambda i: (0, i, 0)),
        ),
        compiler_params=pltpu.CompilerParams(
            dimension_semantics=("parallel",)),
        cost_estimate=pl.CostEstimate(
            flops=flops, transcendentals=transcendentals,
            bytes_accessed=bytes_accessed),
    )(*flat)
    return xs[:, :B, :]


# ---------------------------------------------------------------------------
# Parameter handling, full Generator forward, pure-JAX reference
# ---------------------------------------------------------------------------

def init_ffnn_params(key, sizes):
    """PyTorch nn.Linear-style init (uniform +-1/sqrt(fan_in))."""
    params = []
    for i in range(len(sizes) - 1):
        fan_in, fan_out = sizes[i], sizes[i + 1]
        key, kw, kb = jax.random.split(key, 3)
        bound = 1.0 / (fan_in ** 0.5)
        w = jax.random.uniform(kw, (fan_in, fan_out), jnp.float32, -bound, bound)
        b = jax.random.uniform(kb, (fan_out,), jnp.float32, -bound, bound)
        params.append((w, b))
    return params, key


def pad_ffnn_params(params):
    """Zero-pad every feature dim to a multiple of 128 lanes; weights -> bf16
    (MXU operands), biases stay f32.  Zero padding keeps padded columns exactly
    zero through LipSwish/tanh, so the padded pipeline equals the unpadded one."""
    padded = []
    for w, b in params:
        ip = _round_up(w.shape[0], LANE)
        op = _round_up(w.shape[1], LANE)
        wp = jnp.zeros((ip, op), jnp.float32).at[:w.shape[0], :w.shape[1]].set(w)
        bp = jnp.zeros((1, op), jnp.float32).at[0, :b.shape[0]].set(b)
        padded.append((wp.astype(jnp.bfloat16), bp))
    return padded


def _pad_features(x, width):
    out = jnp.zeros(x.shape[:-1] + (width,), jnp.float32)
    return out.at[..., :x.shape[-1]].set(x)


def generator_forward(init_noise, dw, dt, embed_p, drift_p, diff_p, readout_p,
                      hidden_size, data_size):
    """Generator.forward: embed -> SDE path -> readout.  Returns (ys, xs)."""
    B = init_noise.shape[0]
    T = dw.shape[0] + 1
    in_pad = embed_p[0][0].shape[0]
    h_pad = embed_p[-1][1].shape[1]

    x_in = _pad_features(init_noise.astype(jnp.float32), in_pad)
    x0 = ffnn_forward(x_in, embed_p)                          # [B, h_pad]

    dw_pad = _pad_features(dw.astype(jnp.float32), h_pad)     # [T-1, B, h_pad]
    xs = sde_path_forward(x0, dw_pad, drift_p, diff_p, dt)    # [T, B, h_pad]

    xs_bt = jnp.transpose(xs, (1, 0, 2))                      # [B, T, h_pad]
    ys = ffnn_forward(xs_bt.reshape(B * T, h_pad), readout_p)
    ys = ys[:, :data_size].reshape(B, T, data_size)
    return ys, xs_bt[:, :, :hidden_size]


def reference_forward(init_noise, dw, dt, embed_p, drift_p, diff_p, readout_p,
                      hidden_size, data_size):
    """Plain-JAX reference using the same padded bf16 params / math."""
    B = init_noise.shape[0]
    T = dw.shape[0] + 1
    in_pad = embed_p[0][0].shape[0]
    h_pad = embed_p[-1][1].shape[1]

    x = _mlp_apply(_pad_features(init_noise.astype(jnp.float32), in_pad), embed_p)
    dw_pad = _pad_features(dw.astype(jnp.float32), h_pad)
    xs = [x]
    for t in range(T - 1):
        f = _mlp_apply(x, drift_p)
        g = _mlp_apply(x, diff_p)
        x = x + dt * f + g * dw_pad[t]
        xs.append(x)
    xs_bt = jnp.transpose(jnp.stack(xs, axis=0), (1, 0, 2))
    ys = _mlp_apply(xs_bt.reshape(B * T, h_pad), readout_p)
    ys = ys[:, :data_size].reshape(B, T, data_size)
    return ys, xs_bt[:, :, :hidden_size]


if __name__ == "__main__":
    # Small config consistent with the module.
    init_noise_size = 8
    hidden_size = 16      # SDE state size; diagonal noise => noise_size == hidden_size
    data_size = 4         # readout output dim
    mlp_size = 32
    time_steps = 16
    batch = 8

    key = jax.random.PRNGKey(0)
    embed_raw, key = init_ffnn_params(key, [init_noise_size, mlp_size, hidden_size])
    drift_raw, key = init_ffnn_params(key, [hidden_size, mlp_size, hidden_size])
    diff_raw, key = init_ffnn_params(key, [hidden_size, mlp_size, hidden_size])
    readout_raw, key = init_ffnn_params(key, [hidden_size, mlp_size, data_size])

    embed_p = pad_ffnn_params(embed_raw)
    drift_p = pad_ffnn_params(drift_raw)
    diff_p = pad_ffnn_params(diff_raw)
    readout_p = pad_ffnn_params(readout_raw)

    key, kz, kw = jax.random.split(key, 3)
    init_noise = jax.random.normal(kz, (batch, init_noise_size), jnp.float32)
    ts = jnp.linspace(0.0, 1.0, time_steps)      # uniform grid -> constant dt
    dt = float(ts[1] - ts[0])
    # Brownian increments for the diagonal-noise SDE, dW ~ N(0, dt).
    dw = jax.random.normal(
        kw, (time_steps - 1, batch, hidden_size), jnp.float32) * (dt ** 0.5)

    ys, xs = generator_forward(init_noise, dw, dt, embed_p, drift_p, diff_p,
                               readout_p, hidden_size, data_size)
    ys = jax.block_until_ready(ys)
    xs = jax.block_until_ready(xs)

    ys_ref, xs_ref = reference_forward(init_noise, dw, dt, embed_p, drift_p,
                                       diff_p, readout_p, hidden_size, data_size)

    assert ys.shape == (batch, time_steps, data_size)
    assert xs.shape == (batch, time_steps, hidden_size)
    assert jnp.allclose(xs, xs_ref, atol=5e-2, rtol=5e-2), "hidden path mismatch"
    assert jnp.allclose(ys, ys_ref, atol=1e-2, rtol=1e-2), "readout mismatch"
    print("KERNEL_OK")
</pallas_src>

<mosaic_0001>
module attributes {stable_mosaic.version = 11 : i64} {
  func.func @kernel(%arg0: i32, %arg1: memref<8x128xf32, #tpu.memory_space<vmem>>, %arg2: memref<128x128xbf16, #tpu.memory_space<vmem>>, %arg3: memref<1x128xf32, #tpu.memory_space<vmem>>, %arg4: memref<128x128xbf16, #tpu.memory_space<vmem>>, %arg5: memref<1x128xf32, #tpu.memory_space<vmem>>, %arg6: memref<8x128xf32, #tpu.memory_space<vmem>>) attributes {dimension_semantics = [#tpu.dimension_semantics<parallel>], iteration_bounds = array<i64: 1>, scalar_prefetch = 0 : i64, scratch_operands = 0 : i64, tpu.core_type = #tpu.core_type<tc>, window_params = [{transform_indices = @transform_0, window_bounds = array<i64: 8, 128>}, {pipeline_mode = #tpu.pipeline_mode<synchronous>, transform_indices = @transform_1, window_bounds = array<i64: 128, 128>}, {pipeline_mode = #tpu.pipeline_mode<synchronous>, transform_indices = @transform_2, window_bounds = array<i64: 1, 128>}, {pipeline_mode = #tpu.pipeline_mode<synchronous>, transform_indices = @transform_3, window_bounds = array<i64: 128, 128>}, {pipeline_mode = #tpu.pipeline_mode<synchronous>, transform_indices = @transform_4, window_bounds = array<i64: 1, 128>}, {transform_indices = @transform_5, window_bounds = array<i64: 8, 128>}]} {
    %c0 = arith.constant 0 : index
    %c0_0 = arith.constant 0 : index
    %0 = vector.load %arg2[%c0, %c0_0] : memref<128x128xbf16, #tpu.memory_space<vmem>>, vector<128x128xbf16>
    %c0_1 = arith.constant 0 : index
    %c0_2 = arith.constant 0 : index
    %1 = vector.load %arg3[%c0_1, %c0_2] : memref<1x128xf32, #tpu.memory_space<vmem>>, vector<1x128xf32>
    %c0_3 = arith.constant 0 : index
    %c0_4 = arith.constant 0 : index
    %2 = vector.load %arg4[%c0_3, %c0_4] : memref<128x128xbf16, #tpu.memory_space<vmem>>, vector<128x128xbf16>
    %c0_5 = arith.constant 0 : index
    %c0_6 = arith.constant 0 : index
    %3 = vector.load %arg5[%c0_5, %c0_6] : memref<1x128xf32, #tpu.memory_space<vmem>>, vector<1x128xf32>
    %c0_7 = arith.constant 0 : index
    %c0_8 = arith.constant 0 : index
    %4 = vector.load %arg1[%c0_7, %c0_8] : memref<8x128xf32, #tpu.memory_space<vmem>>, vector<8x128xf32>
    %5 = arith.truncf %4 : vector<8x128xf32> to vector<8x128xbf16>
    %cst = arith.constant dense<0.000000e+00> : vector<8x128xf32>
    %6 = tpu.matmul %5, %0, %cst {dimension_numbers = #tpu.dot_dimension_numbers<[1], [0], [0], [1], [0, 0, 1, 1], [], []>} : vector<8x128xbf16>, vector<128x128xbf16>, vector<8x128xf32> -> vector<8x128xf32>
    %7 = vector.broadcast %1 : vector<1x128xf32> to vector<8x128xf32>
    %8 = arith.addf %6, %7 : vector<8x128xf32>
    %cst_9 = arith.constant 0.908999979 : f32
    %9 = vector.broadcast %cst_9 : f32 to vector<8x128xf32>
    %10 = arith.mulf %9, %8 : vector<8x128xf32>
    %cst_10 = arith.constant 5.000000e-01 : f32
    %11 = vector.broadcast %cst_10 : f32 to vector<8x128xf32>
    %12 = arith.mulf %11, %8 : vector<8x128xf32>
    %13 = math.tanh %12 : vector<8x128xf32>
    %cst_11 = arith.constant 5.000000e-01 : f32
    %14 = vector.broadcast %cst_11 : f32 to vector<8x128xf32>
    %15 = arith.mulf %14, %13 : vector<8x128xf32>
    %cst_12 = arith.constant 5.000000e-01 : f32
    %16 = vector.broadcast %cst_12 : f32 to vector<8x128xf32>
    %17 = arith.addf %15, %16 : vector<8x128xf32>
    %18 = arith.mulf %10, %17 : vector<8x128xf32>
    %19 = arith.truncf %18 : vector<8x128xf32> to vector<8x128xbf16>
    %cst_13 = arith.constant dense<0.000000e+00> : vector<8x128xf32>
    %20 = tpu.matmul %19, %2, %cst_13 {dimension_numbers = #tpu.dot_dimension_numbers<[1], [0], [0], [1], [0, 0, 1, 1], [], []>} : vector<8x128xbf16>, vector<128x128xbf16>, vector<8x128xf32> -> vector<8x128xf32>
    %21 = vector.broadcast %3 : vector<1x128xf32> to vector<8x128xf32>
    %22 = arith.addf %20, %21 : vector<8x128xf32>
    %23 = math.tanh %22 : vector<8x128xf32>
    %c0_14 = arith.constant 0 : index
    %c0_15 = arith.constant 0 : index
    %24 = vector.load %arg6[%c0_14, %c0_15] : memref<8x128xf32, #tpu.memory_space<vmem>>, vector<8x128xf32>
    tpu.vector_store %arg6[%c0_14, %c0_15], %23 {strides = array<i32>} : memref<8x128xf32, #tpu.memory_space<vmem>>, vector<8x128xf32>,
    return
  }
  func.func @transform_0(%arg0: i32) -> (i32, i32) {
    %c0_i32 = arith.constant 0 : i32
    %c0_i32_0 = arith.constant 0 : i32
    return %arg0, %c0_i32 : i32, i32
  }
  func.func @transform_1(%arg0: i32) -> (i32, i32) {
    %c0_i32 = arith.constant 0 : i32
    %c0_i32_0 = arith.constant 0 : i32
    %c0_i32_1 = arith.constant 0 : i32
    return %c0_i32, %c0_i32_0 : i32, i32
  }
  func.func @transform_2(%arg0: i32) -> (i32, i32) {
    %c0_i32 = arith.constant 0 : i32
    %c0_i32_0 = arith.constant 0 : i32
    %c0_i32_1 = arith.constant 0 : i32
    return %c0_i32, %c0_i32_0 : i32, i32
  }
  func.func @transform_3(%arg0: i32) -> (i32, i32) {
    %c0_i32 = arith.constant 0 : i32
    %c0_i32_0 = arith.constant 0 : i32
    %c0_i32_1 = arith.constant 0 : i32
    return %c0_i32, %c0_i32_0 : i32, i32
  }
  func.func @transform_4(%arg0: i32) -> (i32, i32) {
    %c0_i32 = arith.constant 0 : i32
    %c0_i32_0 = arith.constant 0 : i32
    %c0_i32_1 = arith.constant 0 : i32
    return %c0_i32, %c0_i32_0 : i32, i32
  }
  func.func @transform_5(%arg0: i32) -> (i32, i32) {
    %c0_i32 = arith.constant 0 : i32
    %c0_i32_0 = arith.constant 0 : i32
    return %arg0, %c0_i32 : i32, i32
  }
}

</mosaic_0001>

<llo_original>
// kernel: tpu_custom_call.1
$region0: #{tpu_custom_call.1}
  #allocation0 [shape = 'u32[]', space=smem, size = 0x4, offset = 0x4, fixed_abs, tag = 'smem constant byte address 0x4 - core index']
  #allocation1 [shape = 'u32[144,128]{1,0:T(1,128)}', space=vmem, size = 0x12000, scoped, tag = 'internal scratch']
  %s0 = inlined_call_operand.hbm [shape: f32[8,128], index: 0, kind: input, shape index: {}]
  %s1 = inlined_call_operand.hbm [shape: bf16[128,128], index: 1, kind: input, shape index: {}]
  %s2 = inlined_call_operand.vmem [shape: f32[1,128], index: 2, kind: input, shape index: {}]
  %s3 = inlined_call_operand.hbm [shape: bf16[128,128], index: 3, kind: input, shape index: {}]
  %s4 = inlined_call_operand.vmem [shape: f32[1,128], index: 4, kind: input, shape index: {}]
  %s5 = inlined_call_operand.hbm [shape: f32[8,128], index: 5, kind: output, shape index: {}]
  %s6 = sld [smem:[#allocation0]]
  $region42: #{tpu_custom_call.1} parent=0
    _
  %s8 = ssub.s32 1, %s6
  %s9 = scalar_select 0, %s8, %s6
  $region1: #{tpu_custom_call.1} parent=0
    #allocation2 [shape = 'u8[4096]{0}', space=vmem, size = 0x1000, scoped, tag = 'input window, operand 0, single buffered']
    #allocation3 [shape = 's32[1]{0}', space=sflag, size = 0x4, scoped, tag = 'scoped memory for tpu_custom_call.1']
    #allocation4 [shape = 's32[1]{0}', space=sflag, size = 0x4, scoped, tag = 'scoped memory for tpu_custom_call.1']
    #allocation5 [shape = 'u8[32768]{0}', space=vmem, size = 0x8000, scoped, tag = 'input window, operand 1, single buffered']
    #allocation6 [shape = 's32[1]{0}', space=sflag, size = 0x4, scoped, tag = 'scoped memory for tpu_custom_call.1']
    #allocation7 [shape = 'u8[32768]{0}', space=vmem, size = 0x8000, scoped, tag = 'input window, operand 3, single buffered']
    #allocation8 [shape = 'u8[4096]{0}', space=vmem, size = 0x1000, scoped, tag = 'output window, operand 0, single buffered']
    %10 = vsyncpa [#allocation3], 0
    %11 = vsyncpa [#allocation6], 0
    %12 = vsyncpa [#allocation4], 0
    // Predicated region
    $region2: #{tpu_custom_call.1} parent=1 // pred_check
      _
    $region3: #{tpu_custom_call.1} parent=1 // pred_check_branch
      %14 = sbr.rel (0) target = $region5
    $region4: #{tpu_custom_call.1} parent=1 // pred_region
      %s16 = ssub.s32 128, 128
      %17 = vsyncadd [#allocation3], %s16
      %s19 = sshll.u32 [#allocation2], 4
      %s20 = int_to_ptr.vmem [resolvable:$true] %s19
      %22 = dma.hbm_to_vmem [thread:$0]  %s0, 128, %s20, [#allocation3]
    $region5: #{tpu_custom_call.1} parent=1 // pred_fallthru
      _
    // Predicated region
    $region6: #{tpu_custom_call.1} parent=1 // pred_check
      _
    $region7: #{tpu_custom_call.1} parent=1 // pred_check_branch
      %24 = sbr.rel (0) target = $region9
    $region8: #{tpu_custom_call.1} parent=1 // pred_region
      %s26 = ssub.s32 1024, 1024
      %27 = vsyncadd [#allocation6], %s26
      %s28 = sshll.u32 [#allocation5], 4
      %s29 = int_to_ptr.vmem [resolvable:$true] %s28
      %34 = dma.hbm_to_vmem [thread:$0]  %s1, 1024, %s29, [#allocation6], 64, 64, 4
    $region9: #{tpu_custom_call.1} parent=1 // pred_fallthru
      _
    // Predicated region
    $region10: #{tpu_custom_call.1} parent=1 // pred_check
      _
    $region11: #{tpu_custom_call.1} parent=1 // pred_check_branch
      %36 = sbr.rel (0) target = $region13
    $region12: #{tpu_custom_call.1} parent=1 // pred_region
      _
    $region13: #{tpu_custom_call.1} parent=1 // pred_fallthru
      _
    // Predicated region
    $region14: #{tpu_custom_call.1} parent=1 // pred_check
      _
    $region15: #{tpu_custom_call.1} parent=1 // pred_check_branch
      %38 = sbr.rel (0) target = $region17
    $region16: #{tpu_custom_call.1} parent=1 // pred_region
      %s40 = ssub.s32 1024, 1024
      %41 = vsyncadd [#allocation6], %s40
      %s42 = sshll.u32 [#allocation7], 4
      %s43 = int_to_ptr.vmem [resolvable:$true] %s42
      %48 = dma.hbm_to_vmem [thread:$0]  %s3, 1024, %s43, [#allocation6], 64, 64, 4
    $region17: #{tpu_custom_call.1} parent=1 // pred_fallthru
      _
    // Predicated region
    $region18: #{tpu_custom_call.1} parent=1 // pred_check
      _
    $region19: #{tpu_custom_call.1} parent=1 // pred_check_branch
      %50 = sbr.rel (0) target = $region21
    $region20: #{tpu_custom_call.1} parent=1 // pred_region
      _
    $region21: #{tpu_custom_call.1} parent=1 // pred_fallthru
      _
    // Predicated region
    $region22: #{tpu_custom_call.1} parent=1 // pred_check
      _
    $region23: #{tpu_custom_call.1} parent=1 // pred_check_branch
      %52 = sbr.rel (0) target = $region25
    $region24: #{tpu_custom_call.1} parent=1 // pred_region
      %53 = dma.done [#allocation3], 128
    $region25: #{tpu_custom_call.1} parent=1 // pred_fallthru
      _
    // Predicated region
    $region26: #{tpu_custom_call.1} parent=1 // pred_check
      _
    $region27: #{tpu_custom_call.1} parent=1 // pred_check_branch
      %55 = sbr.rel (0) target = $region29
    $region28: #{tpu_custom_call.1} parent=1 // pred_region
      %56 = dma.done [#allocation6], 1024
    $region29: #{tpu_custom_call.1} parent=1 // pred_fallthru
      _
    // Predicated region
    $region30: #{tpu_custom_call.1} parent=1 // pred_check
      _
    $region31: #{tpu_custom_call.1} parent=1 // pred_check_branch
      %58 = sbr.rel (0) target = $region33
    $region32: #{tpu_custom_call.1} parent=1 // pred_region
      %59 = dma.done [#allocation6], 1024
    $region33: #{tpu_custom_call.1} parent=1 // pred_fallthru
      _
    %v61 = vld [vmem:[#allocation5] sm:$0xf]
    %v62 = vld [vmem:[#allocation5 + $0x4] sm:$0xf]
    %v63 = vld [vmem:[#allocation5 + $0x8] sm:$0xf]
    %v64 = vld [vmem:[#allocation5 + $0xc] sm:$0xf]
    %v65 = vld [vmem:[#allocation5 + $0x10] sm:$0xf]
    %v66 = vld [vmem:[#allocation5 + $0x14] sm:$0xf]
    %v67 = vld [vmem:[#allocation5 + $0x18] sm:$0xf]
    %v68 = vld [vmem:[#allocation5 + $0x1c] sm:$0xf]
    %v69 = vld [vmem:[#allocation5 + $0x20] sm:$0xf]
    %v70 = vld [vmem:[#allocation5 + $0x24] sm:$0xf]
    %v71 = vld [vmem:[#allocation5 + $0x28] sm:$0xf]
    %v72 = vld [vmem:[#allocation5 + $0x2c] sm:$0xf]
    %v73 = vld [vmem:[#allocation5 + $0x30] sm:$0xf]
    %v74 = vld [vmem:[#allocation5 + $0x34] sm:$0xf]
    %v75 = vld [vmem:[#allocation5 + $0x38] sm:$0xf]
    %v76 = vld [vmem:[#allocation5 + $0x3c] sm:$0xf]
    %v77 = vld [vmem:[%s2] sm:$0x1]
    %v78 = vld [vmem:[#allocation7] sm:$0xf]
    %v79 = vld [vmem:[#allocation7 + $0x4] sm:$0xf]
    %v80 = vld [vmem:[#allocation7 + $0x8] sm:$0xf]
    %v81 = vld [vmem:[#allocation7 + $0xc] sm:$0xf]
    %v82 = vld [vmem:[#allocation7 + $0x10] sm:$0xf]
    %v83 = vld [vmem:[#allocation7 + $0x14] sm:$0xf]
    %v84 = vld [vmem:[#allocation7 + $0x18] sm:$0xf]
    %v85 = vld [vmem:[#allocation7 + $0x1c] sm:$0xf]
    %v86 = vld [vmem:[#allocation7 + $0x20] sm:$0xf]
    %v87 = vld [vmem:[#allocation7 + $0x24] sm:$0xf]
    %v88 = vld [vmem:[#allocation7 + $0x28] sm:$0xf]
    %v89 = vld [vmem:[#allocation7 + $0x2c] sm:$0xf]
    %v90 = vld [vmem:[#allocation7 + $0x30] sm:$0xf]
    %v91 = vld [vmem:[#allocation7 + $0x34] sm:$0xf]
    %v92 = vld [vmem:[#allocation7 + $0x38] sm:$0xf]
    %v93 = vld [vmem:[#allocation7 + $0x3c] sm:$0xf]
    %v94 = vld [vmem:[%s4] sm:$0x1]
    %v95 = vld [vmem:[#allocation2] sm:$0xff]
    %v96 = vpack.c.bf16 %v95, %v95
    %v98 = vlaneseq
    %v99 = vshrl.u32 %v98, 7
    %v100 = vsub.s32 0, %v99
    %v101 = vrot.slane %v77, %v100
    %v119 = vunpack.c.l.b16 %v61
    %v120 = vunpack.c.l.b16 %v62
    %v121 = vunpack.c.l.b16 %v63
    %v122 = vunpack.c.l.b16 %v64
    %v123 = vunpack.c.l.b16 %v65
    %v124 = vunpack.c.l.b16 %v66
    %v125 = vunpack.c.l.b16 %v67
    %v126 = vunpack.c.l.b16 %v68
    %v127 = vunpack.c.l.b16 %v69
    %v128 = vunpack.c.l.b16 %v70
    %v129 = vunpack.c.l.b16 %v71
    %v130 = vunpack.c.l.b16 %v72
    %v131 = vunpack.c.l.b16 %v73
    %v132 = vunpack.c.l.b16 %v74
    %v133 = vunpack.c.l.b16 %v75
    %v134 = vunpack.c.l.b16 %v76
    %v135 = vpack.c.b16 %v120, %v119
    %v136 = vpack.c.b16 %v122, %v121
    %v137 = vpack.c.b16 %v124, %v123
    %v138 = vpack.c.b16 %v126, %v125
    %v139 = vpack.c.b16 %v128, %v127
    %v140 = vpack.c.b16 %v130, %v129
    %v141 = vpack.c.b16 %v132, %v131
    %v142 = vpack.c.b16 %v134, %v133
    %151 = vmatprep.subr.bf16.mxu0 0
    %152 = vmatpush1.bf16.msra.mxu0 %v135
    %153 = vmatprep.subr.bf16.mxu0 0
    %154 = vmatpush1.bf16.msra.mxu0 %v136
    %155 = vmatprep.subr.bf16.mxu0 0
    %156 = vmatpush1.bf16.msra.mxu0 %v137
    %157 = vmatprep.subr.bf16.mxu0 0
    %158 = vmatpush1.bf16.msra.mxu0 %v138
    %159 = vmatprep.subr.bf16.mxu0 0
    %160 = vmatpush1.bf16.msra.mxu0 %v139
    %161 = vmatprep.subr.bf16.mxu0 0
    %162 = vmatpush1.bf16.msra.mxu0 %v140
    %163 = vmatprep.subr.bf16.mxu0 0
    %164 = vmatpush1.bf16.msra.mxu0 %v141
    %165 = vmatprep.subr.bf16.mxu0 0
    %166 = vmatpush1.bf16.msra.mxu0 %v142
    %167 = vmatprep.subr.bf16.mxu0 0
    %168 = vmatpush1.bf16.msra.mxu0 0
    %169 = vmatprep.subr.bf16.mxu0 0
    %170 = vmatpush1.bf16.msra.mxu0 0
    %171 = vmatprep.subr.bf16.mxu0 0
    %172 = vmatpush1.bf16.msra.mxu0 0
    %173 = vmatprep.subr.bf16.mxu0 0
    %174 = vmatpush1.bf16.msra.mxu0 0
    %175 = vmatprep.subr.bf16.mxu0 0
    %176 = vmatpush1.bf16.msra.mxu0 0
    %177 = vmatprep.subr.bf16.mxu0 0
    %178 = vmatpush1.bf16.msra.mxu0 0
    %179 = vmatprep.subr.bf16.mxu0 0
    %180 = vmatpush1.bf16.msra.mxu0 0
    %181 = vmatprep.subr.bf16.mxu0 0
    %182 = vmatpush1.bf16.msra.mxu0 0
    %183 = vmatprep.mubr.bf16.mxu0 0
    %184 = vmatmul.mubr.bf16.gmra.mrb[0].mxu0 %v96
    %v185 = vpop.f32.mrb[0].mxu0
    %v186 = vadd.f32 %v101, %v185
    %v187 = vpop.f32.mrb[0].mxu0
    %v188 = vpop.f32.mrb[0].mxu0
    %v189 = vpop.f32.mrb[0].mxu0
    %190 = vdwg.mxu0
    %v191 = vmul.f32 %v186, 0.909
    %v192 = vmul.f32 %v186, 0.5
    %v193 = vtanh.pop %v192
    %v194 = vmul.f32 %v193, 0.5
    %v195 = vadd.f32 %v194, 0.5
    %v196 = vmul.f32 %v191, %v195
    %v197 = vpack.c.bf16 %v196, %v196
    %v199 = vlaneseq
    %v200 = vshrl.u32 %v199, 7
    %v201 = vsub.s32 0, %v200
    %v202 = vrot.slane %v94, %v201
    %v220 = vunpack.c.l.b16 %v78
    %v221 = vunpack.c.l.b16 %v79
    %v222 = vunpack.c.l.b16 %v80
    %v223 = vunpack.c.l.b16 %v81
    %v224 = vunpack.c.l.b16 %v82
    %v225 = vunpack.c.l.b16 %v83
    %v226 = vunpack.c.l.b16 %v84
    %v227 = vunpack.c.l.b16 %v85
    %v228 = vunpack.c.l.b16 %v86
    %v229 = vunpack.c.l.b16 %v87
    %v230 = vunpack.c.l.b16 %v88
    %v231 = vunpack.c.l.b16 %v89
    %v232 = vunpack.c.l.b16 %v90
    %v233 = vunpack.c.l.b16 %v91
    %v234 = vunpack.c.l.b16 %v92
    %v235 = vunpack.c.l.b16 %v93
    %v236 = vpack.c.b16 %v221, %v220
    %v237 = vpack.c.b16 %v223, %v222
    %v238 = vpack.c.b16 %v225, %v224
    %v239 = vpack.c.b16 %v227, %v226
    %v240 = vpack.c.b16 %v229, %v228
    %v241 = vpack.c.b16 %v231, %v230
    %v242 = vpack.c.b16 %v233, %v232
    %v243 = vpack.c.b16 %v235, %v234
    %252 = vmatprep.subr.bf16.mxu0 0
    %253 = vmatpush1.bf16.msra.mxu0 %v236
    %254 = vmatprep.subr.bf16.mxu0 0
    %255 = vmatpush1.bf16.msra.mxu0 %v237
    %256 = vmatprep.subr.bf16.mxu0 0
    %257 = vmatpush1.bf16.msra.mxu0 %v238
    %258 = vmatprep.subr.bf16.mxu0 0
    %259 = vmatpush1.bf16.msra.mxu0 %v239
    %260 = vmatprep.subr.bf16.mxu0 0
    %261 = vmatpush1.bf16.msra.mxu0 %v240
    %262 = vmatprep.subr.bf16.mxu0 0
    %263 = vmatpush1.bf16.msra.mxu0 %v241
    %264 = vmatprep.subr.bf16.mxu0 0
    %265 = vmatpush1.bf16.msra.mxu0 %v242
    %266 = vmatprep.subr.bf16.mxu0 0
    %267 = vmatpush1.bf16.msra.mxu0 %v243
    %268 = vmatprep.subr.bf16.mxu0 0
    %269 = vmatpush1.bf16.msra.mxu0 0
    %270 = vmatprep.subr.bf16.mxu0 0
    %271 = vmatpush1.bf16.msra.mxu0 0
    %272 = vmatprep.subr.bf16.mxu0 0
    %273 = vmatpush1.bf16.msra.mxu0 0
    %274 = vmatprep.subr.bf16.mxu0 0
    %275 = vmatpush1.bf16.msra.mxu0 0
    %276 = vmatprep.subr.bf16.mxu0 0
    %277 = vmatpush1.bf16.msra.mxu0 0
    %278 = vmatprep.subr.bf16.mxu0 0
    %279 = vmatpush1.bf16.msra.mxu0 0
    %280 = vmatprep.subr.bf16.mxu0 0
    %281 = vmatpush1.bf16.msra.mxu0 0
    %282 = vmatprep.subr.bf16.mxu0 0
    %283 = vmatpush1.bf16.msra.mxu0 0
    %284 = vmatprep.mubr.bf16.mxu0 0
    %285 = vmatmul.mubr.bf16.gmra.mrb[0].mxu0 %v197
    %v286 = vpop.f32.mrb[0].mxu0
    %v287 = vadd.f32 %v202, %v286
    %v288 = vpop.f32.mrb[0].mxu0
    %v289 = vpop.f32.mrb[0].mxu0
    %v290 = vpop.f32.mrb[0].mxu0
    %291 = vdwg.mxu0
    %v292 = vtanh.pop %v287
    %293 = vst [vmem:[#allocation8] sm:$0xff] %v292
    // Predicated region
    $region34: #{tpu_custom_call.1} parent=1 // pred_check
      _
    $region35: #{tpu_custom_call.1} parent=1 // pred_check_branch
      %295 = sbr.rel (0) target = $region37
    $region36: #{tpu_custom_call.1} parent=1 // pred_region
      %s297 = ssub.s32 128, 128
      %298 = vsyncadd [#allocation4], %s297
      %s300 = sshll.u32 [#allocation8], 4
      %s301 = int_to_ptr.vmem [resolvable:$true] %s300
      %303 = dma.vmem_to_hbm [thread:$0]  %s301, 128, %s5, [#allocation4]
    $region37: #{tpu_custom_call.1} parent=1 // pred_fallthru
      _
    // Predicated region
    $region38: #{tpu_custom_call.1} parent=1 // pred_check
      _
    $region39: #{tpu_custom_call.1} parent=1 // pred_check_branch
      %305 = sbr.rel (0) target = $region41
    $region40: #{tpu_custom_call.1} parent=1 // pred_region
      %306 = dma.done [#allocation4], 128
    $region41: #{tpu_custom_call.1} parent=1 // pred_fallthru
      _
    %307 = vsyncpa [#allocation3], 1
    %308 = vsyncpa [#allocation6], 1
    %309 = vsyncpa [#allocation4], 1

</llo_original>
